<compile_context>
chip_gen: v6e
topology: v6e:2x2x1
jax: 0.10.0
libtpu: 0.0.40
codegen_flags: <defaults>
</compile_context>

<pallas_src>
import functools

import jax
import jax.numpy as jnp
from jax.experimental import pallas as pl
from jax.experimental.pallas import tpu as pltpu


def _round_up(x, m):
    return ((x + m - 1) // m) * m


def _fused_mlp_kernel(*refs, num_layers, activation):
    """One batch tile through the whole Linear -> act -> dropout(p=0) stack.

    refs = (x_ref, w0, b0, w1, b1, ..., w_{L-1}, b_{L-1}, o0, ..., o_{L-1})
    """
    x_ref = refs[0]
    w_refs = refs[1:1 + 2 * num_layers:2]
    b_refs = refs[2:2 + 2 * num_layers:2]
    o_refs = refs[1 + 2 * num_layers:]

    act = x_ref[...]
    # num_layers is static & small -> fully unrolled at trace time, so the
    # intermediate activation never leaves vregs/VMEM between layers.
    for l in range(num_layers):
        acc = jnp.dot(act, w_refs[l][...], preferred_element_type=jnp.float32)
        acc = acc + b_refs[l][...]                 # bias broadcast over rows
        if activation == "relu":
            acc = jnp.maximum(acc, 0.0)            # VPU
        elif activation == "tanh":
            acc = jnp.tanh(acc)                    # EUP (separate slot)
        # dropout with p == 0.0 (or eval mode) is the identity
        o_refs[l][...] = acc.astype(o_refs[l].dtype)
        act = acc                                  # stays resident in VMEM


def fused_linear_encoder(x_pad, weights_pad, biases_pad, *, activation,
                         tile_m, dims_pad):
    """Run the fused MLP. All arrays are already padded to lane-dense shapes.

    x_pad: [N_pad, dims_pad[0]] f32, N_pad % tile_m == 0.
    weights_pad[l]: [dims_pad[l], dims_pad[l+1]] f32 (transpose of torch W).
    biases_pad[l]:  [1, dims_pad[l+1]] f32.
    Returns a list of num_layers padded per-layer activations.
    """
    num_layers = len(weights_pad)
    n_pad = x_pad.shape[0]
    grid = (n_pad // tile_m,)

    in_specs = [pl.BlockSpec((tile_m, dims_pad[0]), lambda i: (i, 0))]
    flat_params = []
    for l in range(num_layers):
        din, dout = dims_pad[l], dims_pad[l + 1]
        # Constant index maps -> each weight/bias is fetched once and stays
        # resident in VMEM across all batch tiles.
        in_specs.append(pl.BlockSpec((din, dout), lambda i: (0, 0)))
        in_specs.append(pl.BlockSpec((1, dout), lambda i: (0, 0)))
        flat_params.append(weights_pad[l])
        flat_params.append(biases_pad[l])

    out_specs = [pl.BlockSpec((tile_m, dims_pad[l + 1]), lambda i: (i, 0))
                 for l in range(num_layers)]
    out_shape = [jax.ShapeDtypeStruct((n_pad, dims_pad[l + 1]), jnp.float32)
                 for l in range(num_layers)]

    kernel = functools.partial(_fused_mlp_kernel,
                               num_layers=num_layers,
                               activation=activation)

    # Advisory cost estimate for the XLA scheduler.
    flops = 2 * n_pad * sum(dims_pad[l] * dims_pad[l + 1]
                            for l in range(num_layers))
    trans = (n_pad * sum(dims_pad[1:]) if activation == "tanh" else 0)
    bytes_accessed = 4 * (x_pad.size
                          + sum(w.size for w in weights_pad)
                          + sum(b.size for b in biases_pad)
                          + n_pad * sum(dims_pad[1:]))

    outs = pl.pallas_call(
        kernel,
        out_shape=out_shape,
        grid_spec=pl.GridSpec(grid=grid, in_specs=in_specs,
                              out_specs=out_specs),
        compiler_params=pltpu.CompilerParams(
            # Batch tiles are independent -> shard across v7x's 2 TensorCores.
            dimension_semantics=("parallel",)),
        cost_estimate=pl.CostEstimate(flops=flops, transcendentals=trans,
                                      bytes_accessed=bytes_accessed),
    )(x_pad, *flat_params)
    return list(outs)


class LinearEncoderPallas:
    """JAX/Pallas re-implementation of the PyTorch LinearEncoder forward."""

    LANE = 128      # lane-dense padding of feature dims
    SUBLANE = 8     # sublane padding of the batch dim
    MAX_TILE_M = 512  # rows per batch tile (amortizes ~0.35us/grid-step)

    def __init__(self, input_dim, hidden_dim, output_dim, num_layers,
                 activation="relu", dropout=0.0, key=None):
        if num_layers < 1:
            raise ValueError("number of layers should be positive!")
        self.activation = activation
        self.dropout = dropout
        self.num_layers = num_layers
        self.linear_or_not = num_layers == 1
        if key is None:
            key = jax.random.PRNGKey(0)

        if num_layers == 1:
            dims = [input_dim, output_dim]
        else:
            dims = [input_dim] + [hidden_dim] * (num_layers - 1) + [output_dim]
        self.dims = dims
        self.dims_pad = [_round_up(d, self.LANE) for d in dims]

        # Unpadded params (reference / parity with the torch module) and the
        # zero-padded, lane-dense copies used by the kernel (padded ONCE here).
        self.weights, self.biases = [], []
        self.weights_pad, self.biases_pad = [], []
        for l in range(num_layers):
            din, dout = dims[l], dims[l + 1]
            key, kw, kb = jax.random.split(key, 3)
            # kaiming_normal_(nonlinearity='relu'): std = sqrt(2 / fan_in)
            w = (jax.random.normal(kw, (din, dout), jnp.float32)
                 * jnp.sqrt(2.0 / din))
            # nn.Linear bias default: U(-1/sqrt(fan_in), 1/sqrt(fan_in))
            bound = 1.0 / jnp.sqrt(din)
            b = jax.random.uniform(kb, (dout,), jnp.float32, -bound, bound)
            self.weights.append(w)
            self.biases.append(b)

            dinp, doutp = self.dims_pad[l], self.dims_pad[l + 1]
            w_pad = jnp.zeros((dinp, doutp), jnp.float32).at[:din, :dout].set(w)
            b_pad = jnp.zeros((1, doutp), jnp.float32).at[0, :dout].set(b)
            self.weights_pad.append(w_pad)
            self.biases_pad.append(b_pad)

    def __call__(self, x):
        n, din = x.shape
        assert din == self.dims[0]
        # Batch tile: multiple of 8 sublanes, capped at MAX_TILE_M rows.
        tile_m = min(_round_up(n, self.SUBLANE), self.MAX_TILE_M)
        n_pad = _round_up(n, tile_m)
        x_pad = jnp.zeros((n_pad, self.dims_pad[0]), jnp.float32)
        x_pad = x_pad.at[:n, :din].set(x.astype(jnp.float32))

        outs_pad = fused_linear_encoder(
            x_pad, self.weights_pad, self.biases_pad,
            activation=self.activation, tile_m=tile_m, dims_pad=self.dims_pad)

        # Slice back to the logical shapes for mid_f.
        mid_f = [outs_pad[l][:n, :self.dims[l + 1]]
                 for l in range(self.num_layers)]
        return mid_f[-1], mid_f


if __name__ == "__main__":
    # Small deterministic example consistent with the module's forward:
    # batch=8, input_dim=16, hidden_dim=32, output_dim=16, num_layers=3.
    key = jax.random.PRNGKey(0)
    k_in, k_params = jax.random.split(key)
    N, INPUT_DIM, HIDDEN_DIM, OUTPUT_DIM, NUM_LAYERS = 8, 16, 32, 16, 3

    x = jax.random.normal(k_in, (N, INPUT_DIM), jnp.float32)

    enc = LinearEncoderPallas(INPUT_DIM, HIDDEN_DIM, OUTPUT_DIM, NUM_LAYERS,
                              activation="relu", dropout=0.0, key=k_params)

    out, mid_f = enc(x)
    out = jax.block_until_ready(out)
    for m in mid_f:
        jax.block_until_ready(m)

    # Sanity check against a plain-JAX reference (unpadded params).
    ref = x
    ref_mid = []
    for w, b in zip(enc.weights, enc.biases):
        ref = jnp.maximum(ref @ w + b, 0.0)
        ref_mid.append(ref)

    assert out.shape == (N, OUTPUT_DIM)
    assert len(mid_f) == NUM_LAYERS
    assert jnp.allclose(out, ref, atol=1e-5, rtol=1e-5)
    for got, want in zip(mid_f, ref_mid):
        assert got.shape == want.shape
        assert jnp.allclose(got, want, atol=1e-5, rtol=1e-5)

    print("KERNEL_OK")
</pallas_src>

<mosaic_0001>
module attributes {stable_mosaic.version = 11 : i64} {
  func.func @_fused_mlp_kernel(%arg0: i32, %arg1: memref<8x128xf32, #tpu.memory_space<vmem>>, %arg2: memref<128x128xf32, #tpu.memory_space<vmem>>, %arg3: memref<1x128xf32, #tpu.memory_space<vmem>>, %arg4: memref<128x128xf32, #tpu.memory_space<vmem>>, %arg5: memref<1x128xf32, #tpu.memory_space<vmem>>, %arg6: memref<128x128xf32, #tpu.memory_space<vmem>>, %arg7: memref<1x128xf32, #tpu.memory_space<vmem>>, %arg8: memref<8x128xf32, #tpu.memory_space<vmem>>, %arg9: memref<8x128xf32, #tpu.memory_space<vmem>>, %arg10: memref<8x128xf32, #tpu.memory_space<vmem>>) attributes {dimension_semantics = [#tpu.dimension_semantics<parallel>], iteration_bounds = array<i64: 1>, scalar_prefetch = 0 : i64, scratch_operands = 0 : i64, tpu.core_type = #tpu.core_type<tc>, window_params = [{transform_indices = @transform_0, window_bounds = array<i64: 8, 128>}, {pipeline_mode = #tpu.pipeline_mode<synchronous>, transform_indices = @transform_1, window_bounds = array<i64: 128, 128>}, {pipeline_mode = #tpu.pipeline_mode<synchronous>, transform_indices = @transform_2, window_bounds = array<i64: 1, 128>}, {pipeline_mode = #tpu.pipeline_mode<synchronous>, transform_indices = @transform_3, window_bounds = array<i64: 128, 128>}, {pipeline_mode = #tpu.pipeline_mode<synchronous>, transform_indices = @transform_4, window_bounds = array<i64: 1, 128>}, {pipeline_mode = #tpu.pipeline_mode<synchronous>, transform_indices = @transform_5, window_bounds = array<i64: 128, 128>}, {pipeline_mode = #tpu.pipeline_mode<synchronous>, transform_indices = @transform_6, window_bounds = array<i64: 1, 128>}, {transform_indices = @transform_7, window_bounds = array<i64: 8, 128>}, {transform_indices = @transform_8, window_bounds = array<i64: 8, 128>}, {transform_indices = @transform_9, window_bounds = array<i64: 8, 128>}]} {
    %c0 = arith.constant 0 : index
    %c0_0 = arith.constant 0 : index
    %0 = vector.load %arg1[%c0, %c0_0] : memref<8x128xf32, #tpu.memory_space<vmem>>, vector<8x128xf32>
    %c0_1 = arith.constant 0 : index
    %c0_2 = arith.constant 0 : index
    %1 = vector.load %arg2[%c0_1, %c0_2] : memref<128x128xf32, #tpu.memory_space<vmem>>, vector<128x128xf32>
    %cst = arith.constant dense<0.000000e+00> : vector<8x128xf32>
    %2 = tpu.matmul %0, %1, %cst {dimension_numbers = #tpu.dot_dimension_numbers<[1], [0], [0], [1], [0, 0, 1, 1], [], []>} : vector<8x128xf32>, vector<128x128xf32>, vector<8x128xf32> -> vector<8x128xf32>
    %c0_3 = arith.constant 0 : index
    %c0_4 = arith.constant 0 : index
    %3 = vector.load %arg3[%c0_3, %c0_4] : memref<1x128xf32, #tpu.memory_space<vmem>>, vector<1x128xf32>
    %4 = vector.broadcast %3 : vector<1x128xf32> to vector<8x128xf32>
    %5 = arith.addf %2, %4 : vector<8x128xf32>
    %cst_5 = arith.constant 0.000000e+00 : f32
    %6 = vector.broadcast %cst_5 : f32 to vector<8x128xf32>
    %7 = arith.maximumf %5, %6 : vector<8x128xf32>
    %c0_6 = arith.constant 0 : index
    %c0_7 = arith.constant 0 : index
    %8 = vector.load %arg8[%c0_6, %c0_7] : memref<8x128xf32, #tpu.memory_space<vmem>>, vector<8x128xf32>
    tpu.vector_store %arg8[%c0_6, %c0_7], %7 {strides = array<i32>} : memref<8x128xf32, #tpu.memory_space<vmem>>, vector<8x128xf32>,
    %c0_8 = arith.constant 0 : index
    %c0_9 = arith.constant 0 : index
    %9 = vector.load %arg4[%c0_8, %c0_9] : memref<128x128xf32, #tpu.memory_space<vmem>>, vector<128x128xf32>
    %cst_10 = arith.constant dense<0.000000e+00> : vector<8x128xf32>
    %10 = tpu.matmul %7, %9, %cst_10 {dimension_numbers = #tpu.dot_dimension_numbers<[1], [0], [0], [1], [0, 0, 1, 1], [], []>} : vector<8x128xf32>, vector<128x128xf32>, vector<8x128xf32> -> vector<8x128xf32>
    %c0_11 = arith.constant 0 : index
    %c0_12 = arith.constant 0 : index
    %11 = vector.load %arg5[%c0_11, %c0_12] : memref<1x128xf32, #tpu.memory_space<vmem>>, vector<1x128xf32>
    %12 = vector.broadcast %11 : vector<1x128xf32> to vector<8x128xf32>
    %13 = arith.addf %10, %12 : vector<8x128xf32>
    %cst_13 = arith.constant 0.000000e+00 : f32
    %14 = vector.broadcast %cst_13 : f32 to vector<8x128xf32>
    %15 = arith.maximumf %13, %14 : vector<8x128xf32>
    %c0_14 = arith.constant 0 : index
    %c0_15 = arith.constant 0 : index
    %16 = vector.load %arg9[%c0_14, %c0_15] : memref<8x128xf32, #tpu.memory_space<vmem>>, vector<8x128xf32>
    tpu.vector_store %arg9[%c0_14, %c0_15], %15 {strides = array<i32>} : memref<8x128xf32, #tpu.memory_space<vmem>>, vector<8x128xf32>,
    %c0_16 = arith.constant 0 : index
    %c0_17 = arith.constant 0 : index
    %17 = vector.load %arg6[%c0_16, %c0_17] : memref<128x128xf32, #tpu.memory_space<vmem>>, vector<128x128xf32>
    %cst_18 = arith.constant dense<0.000000e+00> : vector<8x128xf32>
    %18 = tpu.matmul %15, %17, %cst_18 {dimension_numbers = #tpu.dot_dimension_numbers<[1], [0], [0], [1], [0, 0, 1, 1], [], []>} : vector<8x128xf32>, vector<128x128xf32>, vector<8x128xf32> -> vector<8x128xf32>
    %c0_19 = arith.constant 0 : index
    %c0_20 = arith.constant 0 : index
    %19 = vector.load %arg7[%c0_19, %c0_20] : memref<1x128xf32, #tpu.memory_space<vmem>>, vector<1x128xf32>
    %20 = vector.broadcast %19 : vector<1x128xf32> to vector<8x128xf32>
    %21 = arith.addf %18, %20 : vector<8x128xf32>
    %cst_21 = arith.constant 0.000000e+00 : f32
    %22 = vector.broadcast %cst_21 : f32 to vector<8x128xf32>
    %23 = arith.maximumf %21, %22 : vector<8x128xf32>
    %c0_22 = arith.constant 0 : index
    %c0_23 = arith.constant 0 : index
    %24 = vector.load %arg10[%c0_22, %c0_23] : memref<8x128xf32, #tpu.memory_space<vmem>>, vector<8x128xf32>
    tpu.vector_store %arg10[%c0_22, %c0_23], %23 {strides = array<i32>} : memref<8x128xf32, #tpu.memory_space<vmem>>, vector<8x128xf32>,
    return
  }
  func.func @transform_0(%arg0: i32) -> (i32, i32) {
    %c0_i32 = arith.constant 0 : i32
    %c0_i32_0 = arith.constant 0 : i32
    return %arg0, %c0_i32 : i32, i32
  }
  func.func @transform_1(%arg0: i32) -> (i32, i32) {
    %c0_i32 = arith.constant 0 : i32
    %c0_i32_0 = arith.constant 0 : i32
    %c0_i32_1 = arith.constant 0 : i32
    return %c0_i32, %c0_i32_0 : i32, i32
  }
  func.func @transform_2(%arg0: i32) -> (i32, i32) {
    %c0_i32 = arith.constant 0 : i32
    %c0_i32_0 = arith.constant 0 : i32
    %c0_i32_1 = arith.constant 0 : i32
    return %c0_i32, %c0_i32_0 : i32, i32
  }
  func.func @transform_3(%arg0: i32) -> (i32, i32) {
    %c0_i32 = arith.constant 0 : i32
    %c0_i32_0 = arith.constant 0 : i32
    %c0_i32_1 = arith.constant 0 : i32
    return %c0_i32, %c0_i32_0 : i32, i32
  }
  func.func @transform_4(%arg0: i32) -> (i32, i32) {
    %c0_i32 = arith.constant 0 : i32
    %c0_i32_0 = arith.constant 0 : i32
    %c0_i32_1 = arith.constant 0 : i32
    return %c0_i32, %c0_i32_0 : i32, i32
  }
  func.func @transform_5(%arg0: i32) -> (i32, i32) {
    %c0_i32 = arith.constant 0 : i32
    %c0_i32_0 = arith.constant 0 : i32
    %c0_i32_1 = arith.constant 0 : i32
    return %c0_i32, %c0_i32_0 : i32, i32
  }
  func.func @transform_6(%arg0: i32) -> (i32, i32) {
    %c0_i32 = arith.constant 0 : i32
    %c0_i32_0 = arith.constant 0 : i32
    %c0_i32_1 = arith.constant 0 : i32
    return %c0_i32, %c0_i32_0 : i32, i32
  }
  func.func @transform_7(%arg0: i32) -> (i32, i32) {
    %c0_i32 = arith.constant 0 : i32
    %c0_i32_0 = arith.constant 0 : i32
    return %arg0, %c0_i32 : i32, i32
  }
  func.func @transform_8(%arg0: i32) -> (i32, i32) {
    %c0_i32 = arith.constant 0 : i32
    %c0_i32_0 = arith.constant 0 : i32
    return %arg0, %c0_i32 : i32, i32
  }
  func.func @transform_9(%arg0: i32) -> (i32, i32) {
    %c0_i32 = arith.constant 0 : i32
    %c0_i32_0 = arith.constant 0 : i32
    return %arg0, %c0_i32 : i32, i32
  }
}

</mosaic_0001>

<llo_original>
// kernel: tpu_custom_call.1
$region0: #{tpu_custom_call.1}
  #allocation0 [shape = 'u32[]', space=smem, size = 0x4, offset = 0x4, fixed_abs, tag = 'smem constant byte address 0x4 - core index']
  #allocation1 [shape = 'u32[144,128]{1,0:T(1,128)}', space=vmem, size = 0x12000, scoped, tag = 'internal scratch']
  %s0 = inlined_call_operand.hbm [shape: f32[8,128], index: 0, kind: input, shape index: {}]
  %s1 = inlined_call_operand.hbm [shape: f32[128,128], index: 1, kind: input, shape index: {}]
  %s2 = inlined_call_operand.vmem [shape: f32[1,128], index: 2, kind: input, shape index: {}]
  %s3 = inlined_call_operand.hbm [shape: f32[128,128], index: 3, kind: input, shape index: {}]
  %s4 = inlined_call_operand.vmem [shape: f32[1,128], index: 4, kind: input, shape index: {}]
  %s5 = inlined_call_operand.hbm [shape: f32[128,128], index: 5, kind: input, shape index: {}]
  %s6 = inlined_call_operand.vmem [shape: f32[1,128], index: 6, kind: input, shape index: {}]
  %s7 = inlined_call_operand.hbm [shape: f32[8,128], index: 7, kind: output, shape index: {0}]
  %s8 = inlined_call_operand.hbm [shape: f32[8,128], index: 8, kind: output, shape index: {1}]
  %s9 = inlined_call_operand.hbm [shape: f32[8,128], index: 9, kind: output, shape index: {2}]
  %10 = xla_tuple %s7, %s8, %s9
  %s11 = sld [smem:[#allocation0]]
  $region70: #{tpu_custom_call.1} parent=0
    _
  %s13 = ssub.s32 1, %s11
  %s14 = scalar_select 0, %s13, %s11
  $region1: #{tpu_custom_call.1} parent=0
    #allocation2 [shape = 'u8[4096]{0}', space=vmem, size = 0x1000, scoped, tag = 'input window, operand 0, single buffered']
    #allocation3 [shape = 's32[1]{0}', space=sflag, size = 0x4, scoped, tag = 'scoped memory for tpu_custom_call.1']
    #allocation4 [shape = 's32[1]{0}', space=sflag, size = 0x4, scoped, tag = 'scoped memory for tpu_custom_call.1']
    #allocation5 [shape = 'u8[65536]{0}', space=vmem, size = 0x10000, scoped, tag = 'input window, operand 1, single buffered']
    #allocation6 [shape = 's32[1]{0}', space=sflag, size = 0x4, scoped, tag = 'scoped memory for tpu_custom_call.1']
    #allocation7 [shape = 'u8[65536]{0}', space=vmem, size = 0x10000, scoped, tag = 'input window, operand 3, single buffered']
    #allocation8 [shape = 'u8[65536]{0}', space=vmem, size = 0x10000, scoped, tag = 'input window, operand 5, single buffered']
    #allocation9 [shape = 's32[1]{0}', space=sflag, size = 0x4, scoped, tag = 'scoped memory for tpu_custom_call.1']
    #allocation10 [shape = 'u8[4096]{0}', space=vmem, size = 0x1000, scoped, tag = 'output window, operand 0, single buffered']
    #allocation11 [shape = 'u8[4096]{0}', space=vmem, size = 0x1000, scoped, tag = 'output window, operand 1, single buffered']
    #allocation12 [shape = 's32[1]{0}', space=sflag, size = 0x4, scoped, tag = 'scoped memory for tpu_custom_call.1']
    #allocation13 [shape = 'u8[4096]{0}', space=vmem, size = 0x1000, scoped, tag = 'output window, operand 2, single buffered']
    %15 = vsyncpa [#allocation3], 0
    %16 = vsyncpa [#allocation6], 0
    %17 = vsyncpa [#allocation9], 0
    %18 = vsyncpa [#allocation4], 0
    %19 = vsyncpa [#allocation12], 0
    // Predicated region
    $region2: #{tpu_custom_call.1} parent=1 // pred_check
      _
    $region3: #{tpu_custom_call.1} parent=1 // pred_check_branch
      %21 = sbr.rel (0) target = $region5
    $region4: #{tpu_custom_call.1} parent=1 // pred_region
      %s23 = ssub.s32 128, 128
      %24 = vsyncadd [#allocation3], %s23
      %s26 = sshll.u32 [#allocation2], 4
      %s27 = int_to_ptr.vmem [resolvable:$true] %s26
      %29 = dma.hbm_to_vmem [thread:$0]  %s0, 128, %s27, [#allocation3]
    $region5: #{tpu_custom_call.1} parent=1 // pred_fallthru
      _
    // Predicated region
    $region6: #{tpu_custom_call.1} parent=1 // pred_check
      _
    $region7: #{tpu_custom_call.1} parent=1 // pred_check_branch
      %31 = sbr.rel (0) target = $region9
    $region8: #{tpu_custom_call.1} parent=1 // pred_region
      %s33 = ssub.s32 2048, 2048
      %34 = vsyncadd [#allocation6], %s33
      %s35 = sshll.u32 [#allocation5], 4
      %s36 = int_to_ptr.vmem [resolvable:$true] %s35
      %41 = dma.hbm_to_vmem [thread:$0]  %s1, 2048, %s36, [#allocation6], 128, 128, 8
    $region9: #{tpu_custom_call.1} parent=1 // pred_fallthru
      _
    // Predicated region
    $region10: #{tpu_custom_call.1} parent=1 // pred_check
      _
    $region11: #{tpu_custom_call.1} parent=1 // pred_check_branch
      %43 = sbr.rel (0) target = $region13
    $region12: #{tpu_custom_call.1} parent=1 // pred_region
      _
    $region13: #{tpu_custom_call.1} parent=1 // pred_fallthru
      _
    // Predicated region
    $region14: #{tpu_custom_call.1} parent=1 // pred_check
      _
    $region15: #{tpu_custom_call.1} parent=1 // pred_check_branch
      %45 = sbr.rel (0) target = $region17
    $region16: #{tpu_custom_call.1} parent=1 // pred_region
      %s47 = ssub.s32 2048, 2048
      %48 = vsyncadd [#allocation6], %s47
      %s49 = sshll.u32 [#allocation7], 4
      %s50 = int_to_ptr.vmem [resolvable:$true] %s49
      %55 = dma.hbm_to_vmem [thread:$0]  %s3, 2048, %s50, [#allocation6], 128, 128, 8
    $region17: #{tpu_custom_call.1} parent=1 // pred_fallthru
      _
    // Predicated region
    $region18: #{tpu_custom_call.1} parent=1 // pred_check
      _
    $region19: #{tpu_custom_call.1} parent=1 // pred_check_branch
      %57 = sbr.rel (0) target = $region21
    $region20: #{tpu_custom_call.1} parent=1 // pred_region
      _
    $region21: #{tpu_custom_call.1} parent=1 // pred_fallthru
      _
    // Predicated region
    $region22: #{tpu_custom_call.1} parent=1 // pred_check
      _
    $region23: #{tpu_custom_call.1} parent=1 // pred_check_branch
      %59 = sbr.rel (0) target = $region25
    $region24: #{tpu_custom_call.1} parent=1 // pred_region
      %s61 = ssub.s32 2048, 2048
      %62 = vsyncadd [#allocation9], %s61
      %s63 = sshll.u32 [#allocation8], 4
      %s64 = int_to_ptr.vmem [resolvable:$true] %s63
      %69 = dma.hbm_to_vmem [thread:$0]  %s5, 2048, %s64, [#allocation9], 128, 128, 8
    $region25: #{tpu_custom_call.1} parent=1 // pred_fallthru
      _
    // Predicated region
    $region26: #{tpu_custom_call.1} parent=1 // pred_check
      _
    $region27: #{tpu_custom_call.1} parent=1 // pred_check_branch
      %71 = sbr.rel (0) target = $region29
    $region28: #{tpu_custom_call.1} parent=1 // pred_region
      _
    $region29: #{tpu_custom_call.1} parent=1 // pred_fallthru
      _
    // Predicated region
    $region30: #{tpu_custom_call.1} parent=1 // pred_check
      _
    $region31: #{tpu_custom_call.1} parent=1 // pred_check_branch
      %73 = sbr.rel (0) target = $region33
    $region32: #{tpu_custom_call.1} parent=1 // pred_region
      %74 = dma.done [#allocation3], 128
    $region33: #{tpu_custom_call.1} parent=1 // pred_fallthru
      _
    // Predicated region
    $region34: #{tpu_custom_call.1} parent=1 // pred_check
      _
    $region35: #{tpu_custom_call.1} parent=1 // pred_check_branch
      %76 = sbr.rel (0) target = $region37
    $region36: #{tpu_custom_call.1} parent=1 // pred_region
      %77 = dma.done [#allocation6], 2048
    $region37: #{tpu_custom_call.1} parent=1 // pred_fallthru
      _
    // Predicated region
    $region38: #{tpu_custom_call.1} parent=1 // pred_check
      _
    $region39: #{tpu_custom_call.1} parent=1 // pred_check_branch
      %79 = sbr.rel (0) target = $region41
    $region40: #{tpu_custom_call.1} parent=1 // pred_region
      %80 = dma.done [#allocation6], 2048
    $region41: #{tpu_custom_call.1} parent=1 // pred_fallthru
      _
    // Predicated region
    $region42: #{tpu_custom_call.1} parent=1 // pred_check
      _
    $region43: #{tpu_custom_call.1} parent=1 // pred_check_branch
      %82 = sbr.rel (0) target = $region45
    $region44: #{tpu_custom_call.1} parent=1 // pred_region
      %83 = dma.done [#allocation9], 2048
    $region45: #{tpu_custom_call.1} parent=1 // pred_fallthru
      _
    %v84 = vld [vmem:[#allocation2] sm:$0xff]
    %v85 = vld [vmem:[#allocation5] sm:$0xff]
    %v86 = vld [vmem:[#allocation5 + $0x8] sm:$0xff]
    %v87 = vld [vmem:[#allocation5 + $0x10] sm:$0xff]
    %v88 = vld [vmem:[#allocation5 + $0x18] sm:$0xff]
    %v89 = vld [vmem:[#allocation5 + $0x20] sm:$0xff]
    %v90 = vld [vmem:[#allocation5 + $0x28] sm:$0xff]
    %v91 = vld [vmem:[#allocation5 + $0x30] sm:$0xff]
    %v92 = vld [vmem:[#allocation5 + $0x38] sm:$0xff]
    %v93 = vld [vmem:[#allocation5 + $0x40] sm:$0xff]
    %v94 = vld [vmem:[#allocation5 + $0x48] sm:$0xff]
    %v95 = vld [vmem:[#allocation5 + $0x50] sm:$0xff]
    %v96 = vld [vmem:[#allocation5 + $0x58] sm:$0xff]
    %v97 = vld [vmem:[#allocation5 + $0x60] sm:$0xff]
    %v98 = vld [vmem:[#allocation5 + $0x68] sm:$0xff]
    %v99 = vld [vmem:[#allocation5 + $0x70] sm:$0xff]
    %v100 = vld [vmem:[#allocation5 + $0x78] sm:$0xff]
    %v101 = vld [vmem:[%s2] sm:$0x1]
    %v103 = vlaneseq
    %v104 = vshrl.u32 %v103, 7
    %v105 = vsub.s32 0, %v104
    %v106 = vrot.slane %v101, %v105
    %108 = vmatprep.subr.mxu0 0.0
    %109 = vmatpush1.msra.mxu0 %v100
    %110 = vmatprep.subr.mxu0 0.0
    %111 = vmatpush1.msra.mxu0 %v99
    %112 = vmatprep.subr.mxu0 0.0
    %113 = vmatpush1.msra.mxu0 %v98
    %114 = vmatprep.subr.mxu0 0.0
    %115 = vmatpush1.msra.mxu0 %v97
    %116 = vmatprep.subr.mxu0 0.0
    %117 = vmatpush1.msra.mxu0 %v96
    %118 = vmatprep.subr.mxu0 0.0
    %119 = vmatpush1.msra.mxu0 %v95
    %120 = vmatprep.subr.mxu0 0.0
    %121 = vmatpush1.msra.mxu0 %v94
    %122 = vmatprep.subr.mxu0 0.0
    %123 = vmatpush1.msra.mxu0 %v93
    %124 = vmatprep.subr.mxu0 0.0
    %125 = vmatpush1.msra.mxu0 %v92
    %126 = vmatprep.subr.mxu0 0.0
    %127 = vmatpush1.msra.mxu0 %v91
    %128 = vmatprep.subr.mxu0 0.0
    %129 = vmatpush1.msra.mxu0 %v90
    %130 = vmatprep.subr.mxu0 0.0
    %131 = vmatpush1.msra.mxu0 %v89
    %132 = vmatprep.subr.mxu0 0.0
    %133 = vmatpush1.msra.mxu0 %v88
    %134 = vmatprep.subr.mxu0 0.0
    %135 = vmatpush1.msra.mxu0 %v87
    %136 = vmatprep.subr.mxu0 0.0
    %137 = vmatpush1.msra.mxu0 %v86
    %138 = vmatprep.subr.mxu0 0.0
    %139 = vmatpush1.msra.mxu0 %v85
    %140 = vmatprep.subr.mxu0 0.0
    %141 = vmatpush2.msra.mxu0 0.0
    %142 = vmatprep.subr.mxu0 0.0
    %143 = vmatpush2.msra.mxu0 0.0
    %144 = vmatprep.subr.mxu0 0.0
    %145 = vmatpush2.msra.mxu0 0.0
    %146 = vmatprep.subr.mxu0 0.0
    %147 = vmatpush2.msra.mxu0 0.0
    %148 = vmatprep.subr.mxu0 0.0
    %149 = vmatpush2.msra.mxu0 0.0
    %150 = vmatprep.subr.mxu0 0.0
    %151 = vmatpush2.msra.mxu0 0.0
    %152 = vmatprep.subr.mxu0 0.0
    %153 = vmatpush2.msra.mxu0 0.0
    %154 = vmatprep.subr.mxu0 0.0
    %155 = vmatpush2.msra.mxu0 0.0
    %156 = vmatprep.subr.mxu0 0.0
    %157 = vmatpush2.msra.mxu0 0.0
    %158 = vmatprep.subr.mxu0 0.0
    %159 = vmatpush2.msra.mxu0 0.0
    %160 = vmatprep.subr.mxu0 0.0
    %161 = vmatpush2.msra.mxu0 0.0
    %162 = vmatprep.subr.mxu0 0.0
    %163 = vmatpush2.msra.mxu0 0.0
    %164 = vmatprep.subr.mxu0 0.0
    %165 = vmatpush2.msra.mxu0 0.0
    %166 = vmatprep.subr.mxu0 0.0
    %167 = vmatpush2.msra.mxu0 0.0
    %168 = vmatprep.subr.mxu0 0.0
    %169 = vmatpush2.msra.mxu0 0.0
    %170 = vmatprep.subr.mxu0 0.0
    %171 = vmatpush2.msra.mxu0 0.0
    %172 = vmatprep.mubr.f32.mxu0 0.0
    %173 = vmatmul.mubr.f32.gmra.mxu0 %v84
    %v174 = vpop.f32.mrf.mxu0
    %v175 = vadd.f32 %v106, %v174
    %v176 = vpop.f32.mrf.mxu0
    %177 = vdwg.mxu0
    %v178 = vmax.f32 %v175, 0.0
    %179 = vst [vmem:[#allocation10] sm:$0xff] %v178
    %v180 = vld [vmem:[#allocation7] sm:$0xff]
    %v181 = vld [vmem:[#allocation7 + $0x8] sm:$0xff]
    %v182 = vld [vmem:[#allocation7 + $0x10] sm:$0xff]
    %v183 = vld [vmem:[#allocation7 + $0x18] sm:$0xff]
    %v184 = vld [vmem:[#allocation7 + $0x20] sm:$0xff]
    %v185 = vld [vmem:[#allocation7 + $0x28] sm:$0xff]
    %v186 = vld [vmem:[#allocation7 + $0x30] sm:$0xff]
    %v187 = vld [vmem:[#allocation7 + $0x38] sm:$0xff]
    %v188 = vld [vmem:[#allocation7 + $0x40] sm:$0xff]
    %v189 = vld [vmem:[#allocation7 + $0x48] sm:$0xff]
    %v190 = vld [vmem:[#allocation7 + $0x50] sm:$0xff]
    %v191 = vld [vmem:[#allocation7 + $0x58] sm:$0xff]
    %v192 = vld [vmem:[#allocation7 + $0x60] sm:$0xff]
    %v193 = vld [vmem:[#allocation7 + $0x68] sm:$0xff]
    %v194 = vld [vmem:[#allocation7 + $0x70] sm:$0xff]
    %v195 = vld [vmem:[#allocation7 + $0x78] sm:$0xff]
    %v196 = vld [vmem:[%s4] sm:$0x1]
    %v198 = vlaneseq
    %v199 = vshrl.u32 %v198, 7
    %v200 = vsub.s32 0, %v199
    %v201 = vrot.slane %v196, %v200
    %203 = vmatprep.subr.mxu0 0.0
    %204 = vmatpush1.msra.mxu0 %v195
    %205 = vmatprep.subr.mxu0 0.0
    %206 = vmatpush1.msra.mxu0 %v194
    %207 = vmatprep.subr.mxu0 0.0
    %208 = vmatpush1.msra.mxu0 %v193
    %209 = vmatprep.subr.mxu0 0.0
    %210 = vmatpush1.msra.mxu0 %v192
    %211 = vmatprep.subr.mxu0 0.0
    %212 = vmatpush1.msra.mxu0 %v191
    %213 = vmatprep.subr.mxu0 0.0
    %214 = vmatpush1.msra.mxu0 %v190
    %215 = vmatprep.subr.mxu0 0.0
    %216 = vmatpush1.msra.mxu0 %v189
    %217 = vmatprep.subr.mxu0 0.0
    %218 = vmatpush1.msra.mxu0 %v188
    %219 = vmatprep.subr.mxu0 0.0
    %220 = vmatpush1.msra.mxu0 %v187
    %221 = vmatprep.subr.mxu0 0.0
    %222 = vmatpush1.msra.mxu0 %v186
    %223 = vmatprep.subr.mxu0 0.0
    %224 = vmatpush1.msra.mxu0 %v185
    %225 = vmatprep.subr.mxu0 0.0
    %226 = vmatpush1.msra.mxu0 %v184
    %227 = vmatprep.subr.mxu0 0.0
    %228 = vmatpush1.msra.mxu0 %v183
    %229 = vmatprep.subr.mxu0 0.0
    %230 = vmatpush1.msra.mxu0 %v182
    %231 = vmatprep.subr.mxu0 0.0
    %232 = vmatpush1.msra.mxu0 %v181
    %233 = vmatprep.subr.mxu0 0.0
    %234 = vmatpush1.msra.mxu0 %v180
    %235 = vmatprep.subr.mxu0 0.0
    %236 = vmatpush2.msra.mxu0 0.0
    %237 = vmatprep.subr.mxu0 0.0
    %238 = vmatpush2.msra.mxu0 0.0
    %239 = vmatprep.subr.mxu0 0.0
    %240 = vmatpush2.msra.mxu0 0.0
    %241 = vmatprep.subr.mxu0 0.0
    %242 = vmatpush2.msra.mxu0 0.0
    %243 = vmatprep.subr.mxu0 0.0
    %244 = vmatpush2.msra.mxu0 0.0
    %245 = vmatprep.subr.mxu0 0.0
    %246 = vmatpush2.msra.mxu0 0.0
    %247 = vmatprep.subr.mxu0 0.0
    %248 = vmatpush2.msra.mxu0 0.0
    %249 = vmatprep.subr.mxu0 0.0
    %250 = vmatpush2.msra.mxu0 0.0
    %251 = vmatprep.subr.mxu0 0.0
    %252 = vmatpush2.msra.mxu0 0.0
    %253 = vmatprep.subr.mxu0 0.0
    %254 = vmatpush2.msra.mxu0 0.0
    %255 = vmatprep.subr.mxu0 0.0
    %256 = vmatpush2.msra.mxu0 0.0
    %257 = vmatprep.subr.mxu0 0.0
    %258 = vmatpush2.msra.mxu0 0.0
    %259 = vmatprep.subr.mxu0 0.0
    %260 = vmatpush2.msra.mxu0 0.0
    %261 = vmatprep.subr.mxu0 0.0
    %262 = vmatpush2.msra.mxu0 0.0
    %263 = vmatprep.subr.mxu0 0.0
    %264 = vmatpush2.msra.mxu0 0.0
    %265 = vmatprep.subr.mxu0 0.0
    %266 = vmatpush2.msra.mxu0 0.0
    %267 = vmatprep.mubr.f32.mxu0 0.0
    %268 = vmatmul.mubr.f32.gmra.mxu0 %v178
    %v269 = vpop.f32.mrf.mxu0
    %v270 = vadd.f32 %v201, %v269
    %v271 = vpop.f32.mrf.mxu0
    %272 = vdwg.mxu0
    %v273 = vmax.f32 %v270, 0.0
    %274 = vst [vmem:[#allocation11] sm:$0xff] %v273
    %v275 = vld [vmem:[#allocation8] sm:$0xff]
    %v276 = vld [vmem:[#allocation8 + $0x8] sm:$0xff]
    %v277 = vld [vmem:[#allocation8 + $0x10] sm:$0xff]
    %v278 = vld [vmem:[#allocation8 + $0x18] sm:$0xff]
    %v279 = vld [vmem:[#allocation8 + $0x20] sm:$0xff]
    %v280 = vld [vmem:[#allocation8 + $0x28] sm:$0xff]
    %v281 = vld [vmem:[#allocation8 + $0x30] sm:$0xff]
    %v282 = vld [vmem:[#allocation8 + $0x38] sm:$0xff]
    %v283 = vld [vmem:[#allocation8 + $0x40] sm:$0xff]
    %v284 = vld [vmem:[#allocation8 + $0x48] sm:$0xff]
    %v285 = vld [vmem:[#allocation8 + $0x50] sm:$0xff]
    %v286 = vld [vmem:[#allocation8 + $0x58] sm:$0xff]
    %v287 = vld [vmem:[#allocation8 + $0x60] sm:$0xff]
    %v288 = vld [vmem:[#allocation8 + $0x68] sm:$0xff]
    %v289 = vld [vmem:[#allocation8 + $0x70] sm:$0xff]
    %v290 = vld [vmem:[#allocation8 + $0x78] sm:$0xff]
    %v291 = vld [vmem:[%s6] sm:$0x1]
    %v293 = vlaneseq
    %v294 = vshrl.u32 %v293, 7
    %v295 = vsub.s32 0, %v294
    %v296 = vrot.slane %v291, %v295
    %298 = vmatprep.subr.mxu0 0.0
    %299 = vmatpush1.msra.mxu0 %v290
    %300 = vmatprep.subr.mxu0 0.0
    %301 = vmatpush1.msra.mxu0 %v289
    %302 = vmatprep.subr.mxu0 0.0
    %303 = vmatpush1.msra.mxu0 %v288
    %304 = vmatprep.subr.mxu0 0.0
    %305 = vmatpush1.msra.mxu0 %v287
    %306 = vmatprep.subr.mxu0 0.0
    %307 = vmatpush1.msra.mxu0 %v286
    %308 = vmatprep.subr.mxu0 0.0
    %309 = vmatpush1.msra.mxu0 %v285
    %310 = vmatprep.subr.mxu0 0.0
    %311 = vmatpush1.msra.mxu0 %v284
    %312 = vmatprep.subr.mxu0 0.0
    %313 = vmatpush1.msra.mxu0 %v283
    %314 = vmatprep.subr.mxu0 0.0
    %315 = vmatpush1.msra.mxu0 %v282
    %316 = vmatprep.subr.mxu0 0.0
    %317 = vmatpush1.msra.mxu0 %v281
    %318 = vmatprep.subr.mxu0 0.0
    %319 = vmatpush1.msra.mxu0 %v280
    %320 = vmatprep.subr.mxu0 0.0
    %321 = vmatpush1.msra.mxu0 %v279
    %322 = vmatprep.subr.mxu0 0.0
    %323 = vmatpush1.msra.mxu0 %v278
    %324 = vmatprep.subr.mxu0 0.0
    %325 = vmatpush1.msra.mxu0 %v277
    %326 = vmatprep.subr.mxu0 0.0
    %327 = vmatpush1.msra.mxu0 %v276
    %328 = vmatprep.subr.mxu0 0.0
    %329 = vmatpush1.msra.mxu0 %v275
    %330 = vmatprep.subr.mxu0 0.0
    %331 = vmatpush2.msra.mxu0 0.0
    %332 = vmatprep.subr.mxu0 0.0
    %333 = vmatpush2.msra.mxu0 0.0
    %334 = vmatprep.subr.mxu0 0.0
    %335 = vmatpush2.msra.mxu0 0.0
    %336 = vmatprep.subr.mxu0 0.0
    %337 = vmatpush2.msra.mxu0 0.0
    %338 = vmatprep.subr.mxu0 0.0
    %339 = vmatpush2.msra.mxu0 0.0
    %340 = vmatprep.subr.mxu0 0.0
    %341 = vmatpush2.msra.mxu0 0.0
    %342 = vmatprep.subr.mxu0 0.0
    %343 = vmatpush2.msra.mxu0 0.0
    %344 = vmatprep.subr.mxu0 0.0
    %345 = vmatpush2.msra.mxu0 0.0
    %346 = vmatprep.subr.mxu0 0.0
    %347 = vmatpush2.msra.mxu0 0.0
    %348 = vmatprep.subr.mxu0 0.0
    %349 = vmatpush2.msra.mxu0 0.0
    %350 = vmatprep.subr.mxu0 0.0
    %351 = vmatpush2.msra.mxu0 0.0
    %352 = vmatprep.subr.mxu0 0.0
    %353 = vmatpush2.msra.mxu0 0.0
    %354 = vmatprep.subr.mxu0 0.0
    %355 = vmatpush2.msra.mxu0 0.0
    %356 = vmatprep.subr.mxu0 0.0
    %357 = vmatpush2.msra.mxu0 0.0
    %358 = vmatprep.subr.mxu0 0.0
    %359 = vmatpush2.msra.mxu0 0.0
    %360 = vmatprep.subr.mxu0 0.0
    %361 = vmatpush2.msra.mxu0 0.0
    %362 = vmatprep.mubr.f32.mxu0 0.0
    %363 = vmatmul.mubr.f32.gmra.mxu0 %v273
    %v364 = vpop.f32.mrf.mxu0
    %v365 = vadd.f32 %v296, %v364
    %v366 = vpop.f32.mrf.mxu0
    %367 = vdwg.mxu0
    %v368 = vmax.f32 %v365, 0.0
    %369 = vst [vmem:[#allocation13] sm:$0xff] %v368
    // Predicated region
    $region46: #{tpu_custom_call.1} parent=1 // pred_check
      _
    $region47: #{tpu_custom_call.1} parent=1 // pred_check_branch
      %371 = sbr.rel (0) target = $region49
    $region48: #{tpu_custom_call.1} parent=1 // pred_region
      %s373 = ssub.s32 128, 128
      %374 = vsyncadd [#allocation4], %s373
      %s376 = sshll.u32 [#allocation10], 4
      %s377 = int_to_ptr.vmem [resolvable:$true] %s376
      %379 = dma.vmem_to_hbm [thread:$0]  %s377, 128, %s7, [#allocation4]
    $region49: #{tpu_custom_call.1} parent=1 // pred_fallthru
      _
    // Predicated region
    $region50: #{tpu_custom_call.1} parent=1 // pred_check
      _
    $region51: #{tpu_custom_call.1} parent=1 // pred_check_branch
      %381 = sbr.rel (0) target = $region53
    $region52: #{tpu_custom_call.1} parent=1 // pred_region
      %s383 = ssub.s32 128, 128
      %384 = vsyncadd [#allocation12], %s383
      %s386 = sshll.u32 [#allocation11], 4
      %s387 = int_to_ptr.vmem [resolvable:$true] %s386
      %389 = dma.vmem_to_hbm [thread:$0]  %s387, 128, %s8, [#allocation12]
    $region53: #{tpu_custom_call.1} parent=1 // pred_fallthru
      _
    // Predicated region
    $region54: #{tpu_custom_call.1} parent=1 // pred_check
      _
    $region55: #{tpu_custom_call.1} parent=1 // pred_check_branch
      %391 = sbr.rel (0) target = $region57
    $region56: #{tpu_custom_call.1} parent=1 // pred_region
      %s393 = ssub.s32 128, 128
      %394 = vsyncadd [#allocation12], %s393
      %s396 = sshll.u32 [#allocation13], 4
      %s397 = int_to_ptr.vmem [resolvable:$true] %s396
      %399 = dma.vmem_to_hbm [thread:$0]  %s397, 128, %s9, [#allocation12]
    $region57: #{tpu_custom_call.1} parent=1 // pred_fallthru
      _
    // Predicated region
    $region58: #{tpu_custom_call.1} parent=1 // pred_check
      _
    $region59: #{tpu_custom_call.1} parent=1 // pred_check_branch
      %401 = sbr.rel (0) target = $region61
    $region60: #{tpu_custom_call.1} parent=1 // pred_region
      %402 = dma.done [#allocation4], 128
    $region61: #{tpu_custom_call.1} parent=1 // pred_fallthru
      _
    // Predicated region
    $region62: #{tpu_custom_call.1} parent=1 // pred_check
      _
    $region63: #{tpu_custom_call.1} parent=1 // pred_check_branch
      %404 = sbr.rel (0) target = $region65
    $region64: #{tpu_custom_call.1} parent=1 // pred_region
      %405 = dma.done [#allocation12], 128
    $region65: #{tpu_custom_call.1} parent=1 // pred_fallthru
      _
    // Predicated region
    $region66: #{tpu_custom_call.1} parent=1 // pred_check
      _
    $region67: #{tpu_custom_call.1} parent=1 // pred_check_branch
      %407 = sbr.rel (0) target = $region69
    $region68: #{tpu_custom_call.1} parent=1 // pred_region
      %408 = dma.done [#allocation12], 128
    $region69: #{tpu_custom_call.1} parent=1 // pred_fallthru
      _
    %409 = vsyncpa [#allocation3], 1
    %410 = vsyncpa [#allocation6], 1
    %411 = vsyncpa [#allocation9], 1
    %412 = vsyncpa [#allocation4], 1
    %413 = vsyncpa [#allocation12], 1

</llo_original>
